<compile_context>
chip_gen: v7x
topology: tpu7x:2x2x1
jax: 0.10.0
libtpu: 0.0.40
codegen_flags: <defaults>
</compile_context>

<pallas_src>
import jax
import jax.numpy as jnp
from jax.experimental import pallas as pl
from jax.experimental.pallas import tpu as pltpu


def make_textcnn_kernel(B, L, E, F, kernel_sizes, C):
    """Build the fused conv/max/relu/fc kernel for fixed static shapes.

    The fused conv RHS W_cat is packed branch-major, tap-ordered:
      columns [off_i + d*F : off_i + (d+1)*F] hold branch i, tap d,
      with off_i = sum_{j<i} k_j * F.
    """
    # Branch-major column offsets into the fused RHS.
    offs, off = [], 0
    for k in kernel_sizes:
        offs.append(off)
        off += k * F
    w_tot = off

    def kernel(emb_ref, wcat_ref, bcat_ref, fcw_ref, fcb_ref, out_ref):
        # 1) One wide MXU matmul for all taps of all branches:
        #    (B*L, E) @ (E, sum(k)*F), bf16 operands, f32 accumulation.
        y = jnp.dot(emb_ref[...], wcat_ref[...],
                    preferred_element_type=jnp.float32)
        y = y.reshape(B, L, w_tot)

        # 2) Recover each branch's conv output with static shifted slice-adds
        #    (pure value/vreg math, no scratch, no masked stores), then
        #    max-over-time per branch on its valid window (no -inf masking needed).
        pooled_parts = []
        for i, k in enumerate(kernel_sizes):
            T = L - k + 1
            base = offs[i]
            conv = y[:, 0:T, base:base + F]                       # tap 0 (init, no zeros)
            for d in range(1, k):
                conv = conv + y[:, d:d + T, base + d * F: base + (d + 1) * F]
            pooled_parts.append(jnp.max(conv, axis=1))            # (B, F) f32
        pooled = jnp.concatenate(pooled_parts, axis=1)            # (B, K*F)

        # 3) Bias (constant over time -> equivalent after the max), relu, single FC matmul.
        feat = jnp.maximum(pooled + bcat_ref[...], 0.0)           # (B, K*F) f32
        # TODO(synk): dropout omitted (eval-mode identity).
        out_ref[...] = jnp.dot(feat, fcw_ref[...],
                               preferred_element_type=jnp.float32) + fcb_ref[...]

    return kernel


def textcnn_forward(input_ids, params, kernel_sizes=(3, 4, 5)):
    conv_w, conv_b = params["conv_w"], params["conv_b"]
    F = conv_w[0].shape[-1]
    C = params["fc_b"].shape[-1]

    # Embedding gather is glue (plain JAX); the conv/max/relu/fc hot path is in the kernel.
    embedded = jnp.take(params["emb"], input_ids, axis=0)         # (B, L, E) f32
    B, L, E = embedded.shape

    # Packed, branch-major / tap-ordered conv RHS (E, sum(k)*F) and packed bias (1, K*F).
    w_cat = jnp.concatenate(
        [conv_w[i][d] for i, k in enumerate(kernel_sizes) for d in range(k)], axis=1)
    b_cat = jnp.concatenate(conv_b, axis=1)

    kernel = make_textcnn_kernel(B, L, E, F, tuple(kernel_sizes), C)
    args = (embedded.reshape(B * L, E).astype(jnp.bfloat16),  # bf16 MXU operand
            w_cat.astype(jnp.bfloat16),
            b_cat, params["fc_w"], params["fc_b"])

    return pl.pallas_call(
        kernel,
        out_shape=jax.ShapeDtypeStruct((B, C), jnp.float32),
        in_specs=[pl.BlockSpec(memory_space=pltpu.MemorySpace.VMEM) for _ in args],
        out_specs=pl.BlockSpec(memory_space=pltpu.MemorySpace.VMEM),
    )(*args)


def ref_forward(input_ids, params, conv_dtype=jnp.float32):
    """Pure-JAX reference mirroring the PyTorch forward (dropout = identity).

    conv_dtype=f32  -> faithful f32 reference.
    conv_dtype=bf16 -> mirrors the kernel's bf16-operand / f32-accumulate conv numerics.
    """
    emb = jnp.take(params["emb"], input_ids, axis=0)              # (B, L, E)
    feats = []
    for w, b in zip(params["conv_w"], params["conv_b"]):
        k = w.shape[0]
        T = emb.shape[1] - k + 1
        conv = sum(jnp.einsum("bte,ef->btf",
                              emb[:, j:j + T, :].astype(conv_dtype),
                              w[j].astype(conv_dtype),
                              preferred_element_type=jnp.float32)
                   for j in range(k)) + b[None, :, :]
        feats.append(jnp.maximum(conv.max(axis=1), 0.0))
    x = jnp.concatenate(feats, axis=1)
    return x @ params["fc_w"] + params["fc_b"]


if __name__ == "__main__":
    vocab_size, emb_size, num_filters = 50, 32, 8
    kernel_sizes = (3, 4, 5)
    num_classes = 4
    B, L = 4, 16

    key = jax.random.PRNGKey(0)
    keys = iter(jax.random.split(key, 4 + 2 * len(kernel_sizes)))
    params = {
        "emb": jax.random.normal(next(keys), (vocab_size, emb_size), jnp.float32),
        # conv weights stored as (k, E, F) (= PyTorch Conv1d weight (F,E,k) transposed)
        "conv_w": [0.1 * jax.random.normal(next(keys), (k, emb_size, num_filters),
                                           jnp.float32) for k in kernel_sizes],
        "conv_b": [0.1 * jax.random.normal(next(keys), (1, num_filters), jnp.float32)
                   for _ in kernel_sizes],
        # fc weight stored input-major: (len(kernel_sizes)*F, C) = torch fc.weight.T
        "fc_w": 0.1 * jax.random.normal(
            next(keys), (len(kernel_sizes) * num_filters, num_classes), jnp.float32),
        "fc_b": 0.1 * jax.random.normal(next(keys), (1, num_classes), jnp.float32),
    }
    input_ids = jax.random.randint(next(keys), (B, L), 0, vocab_size, dtype=jnp.int32)

    out = jax.block_until_ready(textcnn_forward(input_ids, params, kernel_sizes))
    assert out.shape == (B, num_classes)

    # Tight check vs. a reference that mirrors the kernel's bf16-operand conv numerics
    # (catches any structural/shift/packing bug).
    ref_bf16 = ref_forward(input_ids, params, conv_dtype=jnp.bfloat16)
    assert jnp.allclose(out, ref_bf16, atol=1e-4, rtol=1e-4), (out, ref_bf16)

    # Loose check vs. the faithful f32 reference (slack accounts for bf16 MXU operands).
    ref_f32 = ref_forward(input_ids, params, conv_dtype=jnp.float32)
    assert jnp.allclose(out, ref_f32, atol=2e-2, rtol=2e-2), (out, ref_f32)

    print("KERNEL_OK")
</pallas_src>

<mosaic_0001>
module attributes {stable_mosaic.version = 11 : i64} {
  func.func @kernel(%arg0: memref<64x32xbf16, #tpu.memory_space<vmem>>, %arg1: memref<32x96xbf16, #tpu.memory_space<vmem>>, %arg2: memref<1x24xf32, #tpu.memory_space<vmem>>, %arg3: memref<24x4xf32, #tpu.memory_space<vmem>>, %arg4: memref<1x4xf32, #tpu.memory_space<vmem>>, %arg5: memref<4x4xf32, #tpu.memory_space<vmem>>) attributes {dimension_semantics = [], scalar_prefetch = 0 : i64, scratch_operands = 0 : i64, tpu.core_type = #tpu.core_type<tc>} {
    %c0 = arith.constant 0 : index
    %c0_0 = arith.constant 0 : index
    %0 = vector.load %arg0[%c0, %c0_0] : memref<64x32xbf16, #tpu.memory_space<vmem>>, vector<64x32xbf16>
    %c0_1 = arith.constant 0 : index
    %c0_2 = arith.constant 0 : index
    %1 = vector.load %arg1[%c0_1, %c0_2] : memref<32x96xbf16, #tpu.memory_space<vmem>>, vector<32x96xbf16>
    %cst = arith.constant dense<0.000000e+00> : vector<64x96xf32>
    %2 = tpu.matmul %0, %1, %cst {dimension_numbers = #tpu.dot_dimension_numbers<[1], [0], [0], [1], [0, 0, 1, 1], [], []>} : vector<64x32xbf16>, vector<32x96xbf16>, vector<64x96xf32> -> vector<64x96xf32>
    %3 = vector.shape_cast %2 : vector<64x96xf32> to vector<4x16x96xf32>
    %4 = vector.extract_strided_slice %3 {offsets = [0, 0, 0], sizes = [4, 14, 8], strides = [1, 1, 1]} : vector<4x16x96xf32> to vector<4x14x8xf32>
    %5 = vector.extract_strided_slice %3 {offsets = [0, 1, 8], sizes = [4, 14, 8], strides = [1, 1, 1]} : vector<4x16x96xf32> to vector<4x14x8xf32>
    %6 = arith.addf %4, %5 : vector<4x14x8xf32>
    %7 = vector.extract_strided_slice %3 {offsets = [0, 2, 16], sizes = [4, 14, 8], strides = [1, 1, 1]} : vector<4x16x96xf32> to vector<4x14x8xf32>
    %8 = arith.addf %6, %7 : vector<4x14x8xf32>
    %cst_3 = arith.constant dense<0xFF800000> : vector<4x8xf32>
    %9 = vector.multi_reduction <maximumf>, %8, %cst_3 [1] : vector<4x14x8xf32> to vector<4x8xf32>
    %10 = vector.extract_strided_slice %3 {offsets = [0, 0, 24], sizes = [4, 13, 8], strides = [1, 1, 1]} : vector<4x16x96xf32> to vector<4x13x8xf32>
    %11 = vector.extract_strided_slice %3 {offsets = [0, 1, 32], sizes = [4, 13, 8], strides = [1, 1, 1]} : vector<4x16x96xf32> to vector<4x13x8xf32>
    %12 = arith.addf %10, %11 : vector<4x13x8xf32>
    %13 = vector.extract_strided_slice %3 {offsets = [0, 2, 40], sizes = [4, 13, 8], strides = [1, 1, 1]} : vector<4x16x96xf32> to vector<4x13x8xf32>
    %14 = arith.addf %12, %13 : vector<4x13x8xf32>
    %15 = vector.extract_strided_slice %3 {offsets = [0, 3, 48], sizes = [4, 13, 8], strides = [1, 1, 1]} : vector<4x16x96xf32> to vector<4x13x8xf32>
    %16 = arith.addf %14, %15 : vector<4x13x8xf32>
    %cst_4 = arith.constant dense<0xFF800000> : vector<4x8xf32>
    %17 = vector.multi_reduction <maximumf>, %16, %cst_4 [1] : vector<4x13x8xf32> to vector<4x8xf32>
    %18 = vector.extract_strided_slice %3 {offsets = [0, 0, 56], sizes = [4, 12, 8], strides = [1, 1, 1]} : vector<4x16x96xf32> to vector<4x12x8xf32>
    %19 = vector.extract_strided_slice %3 {offsets = [0, 1, 64], sizes = [4, 12, 8], strides = [1, 1, 1]} : vector<4x16x96xf32> to vector<4x12x8xf32>
    %20 = arith.addf %18, %19 : vector<4x12x8xf32>
    %21 = vector.extract_strided_slice %3 {offsets = [0, 2, 72], sizes = [4, 12, 8], strides = [1, 1, 1]} : vector<4x16x96xf32> to vector<4x12x8xf32>
    %22 = arith.addf %20, %21 : vector<4x12x8xf32>
    %23 = vector.extract_strided_slice %3 {offsets = [0, 3, 80], sizes = [4, 12, 8], strides = [1, 1, 1]} : vector<4x16x96xf32> to vector<4x12x8xf32>
    %24 = arith.addf %22, %23 : vector<4x12x8xf32>
    %25 = vector.extract_strided_slice %3 {offsets = [0, 4, 88], sizes = [4, 12, 8], strides = [1, 1, 1]} : vector<4x16x96xf32> to vector<4x12x8xf32>
    %26 = arith.addf %24, %25 : vector<4x12x8xf32>
    %cst_5 = arith.constant dense<0xFF800000> : vector<4x8xf32>
    %27 = vector.multi_reduction <maximumf>, %26, %cst_5 [1] : vector<4x12x8xf32> to vector<4x8xf32>
    %28 = tpu.concatenate %9, %17, %27 in 1 : vector<4x8xf32>, vector<4x8xf32>, vector<4x8xf32> -> vector<4x24xf32>
    %c0_6 = arith.constant 0 : index
    %c0_7 = arith.constant 0 : index
    %29 = vector.load %arg2[%c0_6, %c0_7] : memref<1x24xf32, #tpu.memory_space<vmem>>, vector<1x24xf32>
    %30 = vector.broadcast %29 : vector<1x24xf32> to vector<4x24xf32>
    %31 = arith.addf %28, %30 : vector<4x24xf32>
    %cst_8 = arith.constant 0.000000e+00 : f32
    %32 = vector.broadcast %cst_8 : f32 to vector<4x24xf32>
    %33 = arith.maximumf %31, %32 : vector<4x24xf32>
    %c0_9 = arith.constant 0 : index
    %c0_10 = arith.constant 0 : index
    %34 = vector.load %arg3[%c0_9, %c0_10] : memref<24x4xf32, #tpu.memory_space<vmem>>, vector<24x4xf32>
    %cst_11 = arith.constant dense<0.000000e+00> : vector<4x4xf32>
    %35 = tpu.matmul %33, %34, %cst_11 {dimension_numbers = #tpu.dot_dimension_numbers<[1], [0], [0], [1], [0, 0, 1, 1], [], []>} : vector<4x24xf32>, vector<24x4xf32>, vector<4x4xf32> -> vector<4x4xf32>
    %c0_12 = arith.constant 0 : index
    %c0_13 = arith.constant 0 : index
    %36 = vector.load %arg4[%c0_12, %c0_13] : memref<1x4xf32, #tpu.memory_space<vmem>>, vector<1x4xf32>
    %37 = vector.broadcast %36 : vector<1x4xf32> to vector<4x4xf32>
    %38 = arith.addf %35, %37 : vector<4x4xf32>
    %c0_14 = arith.constant 0 : index
    %c0_15 = arith.constant 0 : index
    %39 = vector.load %arg5[%c0_14, %c0_15] : memref<4x4xf32, #tpu.memory_space<vmem>>, vector<4x4xf32>
    tpu.vector_store %arg5[%c0_14, %c0_15], %38 {strides = array<i32>} : memref<4x4xf32, #tpu.memory_space<vmem>>, vector<4x4xf32>,
    return
  }
}

</mosaic_0001>

<llo_original>
// kernel: tpu_custom_call.1
$region0: #{tpu_custom_call.1}
  #allocation0 [shape = 'u32[]', space=smem, size = 0x4, offset = 0x4, fixed_abs, tag = 'smem constant byte address 0x4 - core index']
  #allocation1 [shape = 'u32[144,128]{1,0:T(1,128)}', space=vmem, size = 0x12000, scoped, tag = 'internal scratch']
  %s0 = inlined_call_operand.vmem [shape: bf16[64,32], index: 0, kind: input, shape index: {}]
  %s1 = inlined_call_operand.vmem [shape: bf16[32,96], index: 1, kind: input, shape index: {}]
  %s2 = inlined_call_operand.vmem [shape: f32[1,24], index: 2, kind: input, shape index: {}]
  %s3 = inlined_call_operand.vmem [shape: f32[24,4], index: 3, kind: input, shape index: {}]
  %s4 = inlined_call_operand.vmem [shape: f32[1,4], index: 4, kind: input, shape index: {}]
  %s5 = inlined_call_operand.hbm [shape: f32[4,4], index: 5, kind: output, shape index: {}]
  %s6 = sld [smem:[#allocation0]]
  $region30: #{tpu_custom_call.1} parent=0
    _
  %s8 = ssub.s32 1, %s6
  %s9 = scalar_select 0, %s8, %s6
  $region1: #{tpu_custom_call.1} parent=0
    #allocation2 [shape = 'u8[2048]{0}', space=vmem, size = 0x800, scoped, tag = 'output window, operand 0, single buffered']
    #allocation3 [shape = 's32[1]{0}', space=sflag, size = 0x4, scoped, tag = 'scoped memory for tpu_custom_call.1']
    %10 = vsyncpa [#allocation3], 0
    // Predicated region
    $region2: #{tpu_custom_call.1} parent=1 // pred_check
      _
    $region3: #{tpu_custom_call.1} parent=1 // pred_check_branch
      %12 = sbr.rel (0) target = $region5
    $region4: #{tpu_custom_call.1} parent=1 // pred_region
      _
    $region5: #{tpu_custom_call.1} parent=1 // pred_fallthru
      _
    // Predicated region
    $region6: #{tpu_custom_call.1} parent=1 // pred_check
      _
    $region7: #{tpu_custom_call.1} parent=1 // pred_check_branch
      %14 = sbr.rel (0) target = $region9
    $region8: #{tpu_custom_call.1} parent=1 // pred_region
      _
    $region9: #{tpu_custom_call.1} parent=1 // pred_fallthru
      _
    // Predicated region
    $region10: #{tpu_custom_call.1} parent=1 // pred_check
      _
    $region11: #{tpu_custom_call.1} parent=1 // pred_check_branch
      %16 = sbr.rel (0) target = $region13
    $region12: #{tpu_custom_call.1} parent=1 // pred_region
      _
    $region13: #{tpu_custom_call.1} parent=1 // pred_fallthru
      _
    // Predicated region
    $region14: #{tpu_custom_call.1} parent=1 // pred_check
      _
    $region15: #{tpu_custom_call.1} parent=1 // pred_check_branch
      %18 = sbr.rel (0) target = $region17
    $region16: #{tpu_custom_call.1} parent=1 // pred_region
      _
    $region17: #{tpu_custom_call.1} parent=1 // pred_fallthru
      _
    // Predicated region
    $region18: #{tpu_custom_call.1} parent=1 // pred_check
      _
    $region19: #{tpu_custom_call.1} parent=1 // pred_check_branch
      %20 = sbr.rel (0) target = $region21
    $region20: #{tpu_custom_call.1} parent=1 // pred_region
      _
    $region21: #{tpu_custom_call.1} parent=1 // pred_fallthru
      _
    %v22 = vld [vmem:[%s0] sm:$0xf]
    %v23 = vld [vmem:[%s0 + $0x4] sm:$0xf]
    %v24 = vld [vmem:[%s0 + $0x8] sm:$0xf]
    %v25 = vld [vmem:[%s0 + $0xc] sm:$0xf]
    %v26 = vld [vmem:[%s0 + $0x10] sm:$0xf]
    %v27 = vld [vmem:[%s0 + $0x14] sm:$0xf]
    %v28 = vld [vmem:[%s0 + $0x18] sm:$0xf]
    %v29 = vld [vmem:[%s0 + $0x1c] sm:$0xf]
    %v30 = vld [vmem:[%s1] sm:$0xf]
    %v31 = vld [vmem:[%s1 + $0x4] sm:$0xf]
    %v32 = vld [vmem:[%s1 + $0x8] sm:$0xf]
    %v33 = vld [vmem:[%s1 + $0xc] sm:$0xf]
    %v42 = vunpack.c.l.b16 %v22
    %v43 = vunpack.c.l.b16 %v23
    %v44 = vunpack.c.l.b16 %v24
    %v45 = vunpack.c.l.b16 %v25
    %v46 = vunpack.c.l.b16 %v26
    %v47 = vunpack.c.l.b16 %v27
    %v48 = vunpack.c.l.b16 %v28
    %v49 = vunpack.c.l.b16 %v29
    %v50 = vpack.c.b16 %v43, %v42
    %v51 = vpack.c.b16 %v45, %v44
    %v52 = vpack.c.b16 %v47, %v46
    %v53 = vpack.c.b16 %v49, %v48
    %v58 = vunpack.c.l.b16 %v30
    %v59 = vunpack.c.l.b16 %v31
    %v60 = vunpack.c.l.b16 %v32
    %v61 = vunpack.c.l.b16 %v33
    %v62 = vpack.c.b16 %v59, %v58
    %v63 = vpack.c.b16 %v61, %v60
    %vm66 = vcmask 261120
    %v68 = vsel %vm66, %v50, 0
    %v71 = vsel %vm66, %v51, 0
    %v74 = vsel %vm66, %v52, 0
    %v77 = vsel %vm66, %v53, 0
    %79 = vmatprep.subr.bf16.mxu0 0
    %80 = vmatpush1.bf16.msra.mxu0 %v62
    %81 = vmatprep.subr.bf16.mxu0 0
    %82 = vmatpush1.bf16.msra.mxu0 %v63
    %83 = vmatprep.subr.bf16.mxu0 0
    %84 = vmatpush1.bf16.msra.mxu0 0
    %85 = vmatprep.subr.bf16.mxu0 0
    %86 = vmatpush1.bf16.msra.mxu0 0
    %87 = vmatprep.subr.bf16.mxu0 0
    %88 = vmatpush1.bf16.msra.mxu0 0
    %89 = vmatprep.subr.bf16.mxu0 0
    %90 = vmatpush1.bf16.msra.mxu0 0
    %91 = vmatprep.subr.bf16.mxu0 0
    %92 = vmatpush1.bf16.msra.mxu0 0
    %93 = vmatprep.subr.bf16.mxu0 0
    %94 = vmatpush1.bf16.msra.mxu0 0
    %95 = vmatprep.subr.bf16.mxu0 0
    %96 = vmatpush1.bf16.msra.mxu0 0
    %97 = vmatprep.subr.bf16.mxu0 0
    %98 = vmatpush1.bf16.msra.mxu0 0
    %99 = vmatprep.subr.bf16.mxu0 0
    %100 = vmatpush1.bf16.msra.mxu0 0
    %101 = vmatprep.subr.bf16.mxu0 0
    %102 = vmatpush1.bf16.msra.mxu0 0
    %103 = vmatprep.subr.bf16.mxu0 0
    %104 = vmatpush1.bf16.msra.mxu0 0
    %105 = vmatprep.subr.bf16.mxu0 0
    %106 = vmatpush1.bf16.msra.mxu0 0
    %107 = vmatprep.subr.bf16.mxu0 0
    %108 = vmatpush1.bf16.msra.mxu0 0
    %109 = vmatprep.subr.bf16.mxu0 0
    %110 = vmatpush1.bf16.msra.mxu0 0
    %111 = vmatprep.mubr.bf16.mxu0 0
    %112 = vmatmul.mubr.bf16.gmra.mrb[0].mxu0 %v68
    %v113 = vpop.f32.mrb[0].mxu0
    %v114 = vadd.f32 0.0, %v113
    %v115 = vpop.f32.mrb[0].mxu0
    %v116 = vpop.f32.mrb[0].mxu0
    %v117 = vadd.f32 0.0, %v116
    %v118 = vpop.f32.mrb[0].mxu0
    %119 = vmatprep.mubr.bf16.mxu0 0
    %120 = vmatmul.mubr.bf16.gmra.mrb[0].mxu0 %v71
    %v121 = vpop.f32.mrb[0].mxu0
    %v122 = vadd.f32 0.0, %v121
    %v123 = vpop.f32.mrb[0].mxu0
    %v124 = vpop.f32.mrb[0].mxu0
    %v125 = vadd.f32 0.0, %v124
    %v126 = vpop.f32.mrb[0].mxu0
    %127 = vmatprep.mubr.bf16.mxu0 0
    %128 = vmatmul.mubr.bf16.gmra.mrb[0].mxu0 %v74
    %v129 = vpop.f32.mrb[0].mxu0
    %v130 = vadd.f32 0.0, %v129
    %v131 = vpop.f32.mrb[0].mxu0
    %v132 = vpop.f32.mrb[0].mxu0
    %v133 = vadd.f32 0.0, %v132
    %v134 = vpop.f32.mrb[0].mxu0
    %135 = vmatprep.mubr.bf16.mxu0 0
    %136 = vmatmul.mubr.bf16.gmra.mrb[0].mxu0 %v77
    %v137 = vpop.f32.mrb[0].mxu0
    %v138 = vadd.f32 0.0, %v137
    %v139 = vpop.f32.mrb[0].mxu0
    %v140 = vpop.f32.mrb[0].mxu0
    %v141 = vadd.f32 0.0, %v140
    %v142 = vpop.f32.mrb[0].mxu0
    %143 = vdwg.mxu0
    %vm152 = vcmask 1046528
    %v153 = vrot.slane %v114, 1
    %v154 = vrot.slane %v117, 1
    %v155 = vsel %vm152, %v153, %v154
    %v156 = vrot.slane %v122, 1
    %v157 = vrot.slane %v125, 1
    %v158 = vsel %vm152, %v156, %v157
    %v159 = vrot.slane %v130, 1
    %v160 = vrot.slane %v133, 1
    %v161 = vsel %vm152, %v159, %v160
    %v162 = vrot.slane %v138, 1
    %v163 = vrot.slane %v141, 1
    %v164 = vsel %vm152, %v162, %v163
    %165 = vrot.lane.b32.xlu0 %v155, 120
    %v166 = vpop.permute.xlu0 %165
    %167 = vrot.lane.b32.xlu0 %v154, 120
    %v168 = vpop.permute.xlu0 %167
    %169 = vrot.lane.b32.xlu0 %v158, 120
    %v170 = vpop.permute.xlu0 %169
    %171 = vrot.lane.b32.xlu0 %v157, 120
    %v172 = vpop.permute.xlu0 %171
    %173 = vrot.lane.b32.xlu0 %v161, 120
    %v174 = vpop.permute.xlu0 %173
    %175 = vrot.lane.b32.xlu0 %v160, 120
    %v176 = vpop.permute.xlu0 %175
    %177 = vrot.lane.b32.xlu0 %v164, 120
    %v178 = vpop.permute.xlu0 %177
    %179 = vrot.lane.b32.xlu0 %v163, 120
    %v180 = vpop.permute.xlu0 %179
    %v189 = vadd.f32 %v114, %v166
    %v190 = vadd.f32 %v117, %v168
    %v191 = vadd.f32 %v122, %v170
    %v192 = vadd.f32 %v125, %v172
    %v193 = vadd.f32 %v130, %v174
    %v194 = vadd.f32 %v133, %v176
    %v195 = vadd.f32 %v138, %v178
    %v196 = vadd.f32 %v141, %v180
    %vm197 = vcmask 1045504
    %v198 = vrot.slane %v114, 2
    %v199 = vrot.slane %v117, 2
    %v200 = vsel %vm197, %v198, %v199
    %v201 = vrot.slane %v122, 2
    %v202 = vrot.slane %v125, 2
    %v203 = vsel %vm197, %v201, %v202
    %v204 = vrot.slane %v130, 2
    %v205 = vrot.slane %v133, 2
    %v206 = vsel %vm197, %v204, %v205
    %v207 = vrot.slane %v138, 2
    %v208 = vrot.slane %v141, 2
    %v209 = vsel %vm197, %v207, %v208
    %210 = vrot.lane.b32.xlu0 %v200, 112
    %v211 = vpop.permute.xlu0 %210
    %212 = vrot.lane.b32.xlu0 %v199, 112
    %v213 = vpop.permute.xlu0 %212
    %214 = vrot.lane.b32.xlu0 %v203, 112
    %v215 = vpop.permute.xlu0 %214
    %216 = vrot.lane.b32.xlu0 %v202, 112
    %v217 = vpop.permute.xlu0 %216
    %218 = vrot.lane.b32.xlu0 %v206, 112
    %v219 = vpop.permute.xlu0 %218
    %220 = vrot.lane.b32.xlu0 %v205, 112
    %v221 = vpop.permute.xlu0 %220
    %222 = vrot.lane.b32.xlu0 %v209, 112
    %v223 = vpop.permute.xlu0 %222
    %224 = vrot.lane.b32.xlu0 %v208, 112
    %v225 = vpop.permute.xlu0 %224
    %v234 = vadd.f32 %v189, %v211
    %v235 = vadd.f32 %v190, %v213
    %v236 = vadd.f32 %v191, %v215
    %v237 = vadd.f32 %v192, %v217
    %v238 = vadd.f32 %v193, %v219
    %v239 = vadd.f32 %v194, %v221
    %v240 = vadd.f32 %v195, %v223
    %v241 = vadd.f32 %v196, %v225
    %vm242 = vcmask 64512
    %v243 = vsel %vm242, %v234, -inf
    %vm244 = vcmask 62464
    %v245 = vsel %vm244, %v235, -inf
    %v246 = vmax.f32 %v243, %v245
    %v247 = vrot.slane %v246, 4
    %v248 = vmax.f32 %v246, %v247
    %v249 = vrot.slane %v248, 2
    %v250 = vmax.f32 %v248, %v249
    %v251 = vrot.slane %v250, 1
    %v252 = vmax.f32 %v250, %v251
    %v253 = vsel %vm242, %v236, -inf
    %v254 = vsel %vm244, %v237, -inf
    %v255 = vmax.f32 %v253, %v254
    %v256 = vrot.slane %v255, 4
    %v257 = vmax.f32 %v255, %v256
    %v258 = vrot.slane %v257, 2
    %v259 = vmax.f32 %v257, %v258
    %v260 = vrot.slane %v259, 1
    %v261 = vmax.f32 %v259, %v260
    %v262 = vsel %vm242, %v238, -inf
    %v263 = vsel %vm244, %v239, -inf
    %v264 = vmax.f32 %v262, %v263
    %v265 = vrot.slane %v264, 4
    %v266 = vmax.f32 %v264, %v265
    %v267 = vrot.slane %v266, 2
    %v268 = vmax.f32 %v266, %v267
    %v269 = vrot.slane %v268, 1
    %v270 = vmax.f32 %v268, %v269
    %v271 = vsel %vm242, %v240, -inf
    %v272 = vsel %vm244, %v241, -inf
    %v273 = vmax.f32 %v271, %v272
    %v274 = vrot.slane %v273, 4
    %v275 = vmax.f32 %v273, %v274
    %v276 = vrot.slane %v275, 2
    %v277 = vmax.f32 %v275, %v276
    %v278 = vrot.slane %v277, 1
    %v279 = vmax.f32 %v277, %v278
    %vm280 = vcmask 1044480
    %v281 = vrot.slane %v114, 3
    %v282 = vrot.slane %v117, 3
    %v283 = vsel %vm280, %v281, %v282
    %v284 = vrot.slane %v122, 3
    %v285 = vrot.slane %v125, 3
    %v286 = vsel %vm280, %v284, %v285
    %v287 = vrot.slane %v130, 3
    %v288 = vrot.slane %v133, 3
    %v289 = vsel %vm280, %v287, %v288
    %v290 = vrot.slane %v138, 3
    %v291 = vrot.slane %v141, 3
    %v292 = vsel %vm280, %v290, %v291
    %293 = vrot.lane.b32.xlu0 %v283, 104
    %v294 = vpop.permute.xlu0 %293
    %295 = vrot.lane.b32.xlu0 %v282, 104
    %v296 = vpop.permute.xlu0 %295
    %297 = vrot.lane.b32.xlu0 %v286, 104
    %v298 = vpop.permute.xlu0 %297
    %299 = vrot.lane.b32.xlu0 %v285, 104
    %v300 = vpop.permute.xlu0 %299
    %301 = vrot.lane.b32.xlu0 %v289, 104
    %v302 = vpop.permute.xlu0 %301
    %303 = vrot.lane.b32.xlu0 %v288, 104
    %v304 = vpop.permute.xlu0 %303
    %305 = vrot.lane.b32.xlu0 %v292, 104
    %v306 = vpop.permute.xlu0 %305
    %307 = vrot.lane.b32.xlu0 %v291, 104
    %v308 = vpop.permute.xlu0 %307
    %v317 = vadd.f32 %v234, %v294
    %v318 = vadd.f32 %v235, %v296
    %v319 = vadd.f32 %v236, %v298
    %v320 = vadd.f32 %v237, %v300
    %v321 = vadd.f32 %v238, %v302
    %v322 = vadd.f32 %v239, %v304
    %v323 = vadd.f32 %v240, %v306
    %v324 = vadd.f32 %v241, %v308
    %vm325 = vcmask 261312
    %v326 = vsel %vm325, %v317, -inf
    %vm327 = vcmask 258240
    %v328 = vsel %vm327, %v318, -inf
    %v329 = vmax.f32 %v326, %v328
    %v330 = vrot.slane %v329, 4
    %v331 = vmax.f32 %v329, %v330
    %v332 = vrot.slane %v331, 2
    %v333 = vmax.f32 %v331, %v332
    %v334 = vrot.slane %v333, 1
    %v335 = vmax.f32 %v333, %v334
    %v336 = vsel %vm325, %v319, -inf
    %v337 = vsel %vm327, %v320, -inf
    %v338 = vmax.f32 %v336, %v337
    %v339 = vrot.slane %v338, 4
    %v340 = vmax.f32 %v338, %v339
    %v341 = vrot.slane %v340, 2
    %v342 = vmax.f32 %v340, %v341
    %v343 = vrot.slane %v342, 1
    %v344 = vmax.f32 %v342, %v343
    %v345 = vsel %vm325, %v321, -inf
    %v346 = vsel %vm327, %v322, -inf
    %v347 = vmax.f32 %v345, %v346
    %v348 = vrot.slane %v347, 4
    %v349 = vmax.f32 %v347, %v348
    %v350 = vrot.slane %v349, 2
    %v351 = vmax.f32 %v349, %v350
    %v352 = vrot.slane %v351, 1
    %v353 = vmax.f32 %v351, %v352
    %v354 = vsel %vm325, %v323, -inf
    %v355 = vsel %vm327, %v324, -inf
    %v356 = vmax.f32 %v354, %v355
    %v357 = vrot.slane %v356, 4
    %v358 = vmax.f32 %v356, %v357
    %v359 = vrot.slane %v358, 2
    %v360 = vmax.f32 %v358, %v359
    %v361 = vrot.slane %v360, 1
    %v362 = vmax.f32 %v360, %v361
    %vm363 = vcmask 1043456
    %v364 = vrot.slane %v114, 4
    %v365 = vrot.slane %v117, 4
    %v366 = vsel %vm363, %v364, %v365
    %v367 = vrot.slane %v122, 4
    %v368 = vrot.slane %v125, 4
    %v369 = vsel %vm363, %v367, %v368
    %v370 = vrot.slane %v130, 4
    %v371 = vrot.slane %v133, 4
    %v372 = vsel %vm363, %v370, %v371
    %v373 = vrot.slane %v138, 4
    %v374 = vrot.slane %v141, 4
    %v375 = vsel %vm363, %v373, %v374
    %376 = vrot.lane.b32.xlu0 %v366, 96
    %v377 = vpop.permute.xlu0 %376
    %378 = vrot.lane.b32.xlu0 %v365, 96
    %v379 = vpop.permute.xlu0 %378
    %380 = vrot.lane.b32.xlu0 %v369, 96
    %v381 = vpop.permute.xlu0 %380
    %382 = vrot.lane.b32.xlu0 %v368, 96
    %v383 = vpop.permute.xlu0 %382
    %384 = vrot.lane.b32.xlu0 %v372, 96
    %v385 = vpop.permute.xlu0 %384
    %386 = vrot.lane.b32.xlu0 %v371, 96
    %v387 = vpop.permute.xlu0 %386
    %388 = vrot.lane.b32.xlu0 %v375, 96
    %v389 = vpop.permute.xlu0 %388
    %390 = vrot.lane.b32.xlu0 %v374, 96
    %v391 = vpop.permute.xlu0 %390
    %v400 = vadd.f32 %v317, %v377
    %v401 = vadd.f32 %v318, %v379
    %v402 = vadd.f32 %v319, %v381
    %v403 = vadd.f32 %v320, %v383
    %v404 = vadd.f32 %v321, %v385
    %v405 = vadd.f32 %v322, %v387
    %v406 = vadd.f32 %v323, %v389
    %v407 = vadd.f32 %v324, %v391
    %vm408 = vcmask 523712
    %v409 = vsel %vm408, %v400, -inf
    %vm410 = vcmask 519616
    %v411 = vsel %vm410, %v401, -inf
    %v412 = vmax.f32 %v409, %v411
    %v413 = vrot.slane %v412, 4
    %v414 = vmax.f32 %v412, %v413
    %v415 = vrot.slane %v414, 2
    %v416 = vmax.f32 %v414, %v415
    %v417 = vrot.slane %v416, 1
    %v418 = vmax.f32 %v416, %v417
    %v419 = vsel %vm408, %v402, -inf
    %v420 = vsel %vm410, %v403, -inf
    %v421 = vmax.f32 %v419, %v420
    %v422 = vrot.slane %v421, 4
    %v423 = vmax.f32 %v421, %v422
    %v424 = vrot.slane %v423, 2
    %v425 = vmax.f32 %v423, %v424
    %v426 = vrot.slane %v425, 1
    %v427 = vmax.f32 %v425, %v426
    %v428 = vsel %vm408, %v404, -inf
    %v429 = vsel %vm410, %v405, -inf
    %v430 = vmax.f32 %v428, %v429
    %v431 = vrot.slane %v430, 4
    %v432 = vmax.f32 %v430, %v431
    %v433 = vrot.slane %v432, 2
    %v434 = vmax.f32 %v432, %v433
    %v435 = vrot.slane %v434, 1
    %v436 = vmax.f32 %v434, %v435
    %v437 = vsel %vm408, %v406, -inf
    %v438 = vsel %vm410, %v407, -inf
    %v439 = vmax.f32 %v437, %v438
    %v440 = vrot.slane %v439, 4
    %v441 = vmax.f32 %v439, %v440
    %v442 = vrot.slane %v441, 2
    %v443 = vmax.f32 %v441, %v442
    %v444 = vrot.slane %v443, 1
    %v445 = vmax.f32 %v443, %v444
    %vm450 = vcmask 1041409
    %v451 = vsel %vm450, %v261, %v252
    %vm452 = vcmask 1042434
    %v453 = vsel %vm452, %v270, %v451
    %vm454 = vcmask 1043459
    %v455 = vsel %vm454, %v279, %v453
    %v461 = vsel %vm450, %v344, %v335
    %v462 = vsel %vm452, %v353, %v461
    %v463 = vsel %vm454, %v362, %v462
    %464 = vrot.lane.b32.xlu0 %v463, 112
    %v465 = vpop.permute.xlu0 %464
    %v471 = vsel %vm450, %v427, %v418
    %v472 = vsel %vm452, %v436, %v471
    %v473 = vsel %vm454, %v445, %v472
    %474 = vrot.lane.b32.xlu0 %v473, 88
    %v475 = vpop.permute.xlu0 %474
    %v477 = vsel %vm242, %v455, %v465
    %vm478 = vcmask 130048
    %v479 = vsel %vm478, %v477, %v475
    %v480 = vld [vmem:[%s2] sm:$0x1]
    %v482 = vlaneseq
    %v483 = vshrl.u32 %v482, 7
    %v484 = vsub.s32 0, %v483
    %v485 = vrot.slane %v480, %v484
    %v487 = vadd.f32 %v479, %v485
    %v488 = vmax.f32 %v487, 0.0
    %v489 = vld [vmem:[%s3] sm:$0xff]
    %v490 = vld [vmem:[%s3 + $0x8] sm:$0xff]
    %v491 = vld [vmem:[%s3 + $0x10] sm:$0xff]
    %v492 = vld [vmem:[%s4] sm:$0x1]
    %v494 = vlaneseq
    %v495 = vshrl.u32 %v494, 7
    %v496 = vsub.s32 0, %v495
    %v497 = vrot.slane %v492, %v496
    %vm499 = vcmask 195584
    %v501 = vsel %vm499, %v488, 0
    %503 = vmatprep.subr.mxu0 0.0
    %504 = vmatpush1.msra.mxu0 %v489
    %505 = vmatprep.subr.mxu0 0.0
    %506 = vmatpush1.msra.mxu0 %v490
    %507 = vmatprep.subr.mxu0 0.0
    %508 = vmatpush1.msra.mxu0 %v491
    %509 = vmatprep.subr.mxu0 0.0
    %510 = vmatpush1.msra.mxu0 0.0
    %511 = vmatprep.subr.mxu0 0.0
    %512 = vmatpush1.msra.mxu0 0.0
    %513 = vmatprep.subr.mxu0 0.0
    %514 = vmatpush1.msra.mxu0 0.0
    %515 = vmatprep.subr.mxu0 0.0
    %516 = vmatpush1.msra.mxu0 0.0
    %517 = vmatprep.subr.mxu0 0.0
    %518 = vmatpush1.msra.mxu0 0.0
    %519 = vmatprep.subr.mxu0 0.0
    %520 = vmatpush1.msra.mxu0 0.0
    %521 = vmatprep.subr.mxu0 0.0
    %522 = vmatpush1.msra.mxu0 0.0
    %523 = vmatprep.subr.mxu0 0.0
    %524 = vmatpush1.msra.mxu0 0.0
    %525 = vmatprep.subr.mxu0 0.0
    %526 = vmatpush1.msra.mxu0 0.0
    %527 = vmatprep.subr.mxu0 0.0
    %528 = vmatpush1.msra.mxu0 0.0
    %529 = vmatprep.subr.mxu0 0.0
    %530 = vmatpush1.msra.mxu0 0.0
    %531 = vmatprep.subr.mxu0 0.0
    %532 = vmatpush1.msra.mxu0 0.0
    %533 = vmatprep.subr.mxu0 0.0
    %534 = vmatpush1.msra.mxu0 0.0
    %535 = vmatprep.subr.mxu0 0.0
    %536 = vmatpush1.msra.mxu0 0.0
    %537 = vmatprep.subr.mxu0 0.0
    %538 = vmatpush1.msra.mxu0 0.0
    %539 = vmatprep.subr.mxu0 0.0
    %540 = vmatpush1.msra.mxu0 0.0
    %541 = vmatprep.subr.mxu0 0.0
    %542 = vmatpush1.msra.mxu0 0.0
    %543 = vmatprep.subr.mxu0 0.0
    %544 = vmatpush1.msra.mxu0 0.0
    %545 = vmatprep.subr.mxu0 0.0
    %546 = vmatpush1.msra.mxu0 0.0
    %547 = vmatprep.subr.mxu0 0.0
    %548 = vmatpush1.msra.mxu0 0.0
    %549 = vmatprep.subr.mxu0 0.0
    %550 = vmatpush1.msra.mxu0 0.0
    %551 = vmatprep.subr.mxu0 0.0
    %552 = vmatpush1.msra.mxu0 0.0
    %553 = vmatprep.subr.mxu0 0.0
    %554 = vmatpush1.msra.mxu0 0.0
    %555 = vmatprep.subr.mxu0 0.0
    %556 = vmatpush1.msra.mxu0 0.0
    %557 = vmatprep.subr.mxu0 0.0
    %558 = vmatpush1.msra.mxu0 0.0
    %559 = vmatprep.subr.mxu0 0.0
    %560 = vmatpush1.msra.mxu0 0.0
    %561 = vmatprep.subr.mxu0 0.0
    %562 = vmatpush1.msra.mxu0 0.0
    %563 = vmatprep.subr.mxu0 0.0
    %564 = vmatpush1.msra.mxu0 0.0
    %565 = vmatprep.subr.mxu0 0.0
    %566 = vmatpush1.msra.mxu0 0.0
    %567 = vmatprep.mubr.f32.mxu0 0.0
    %568 = vmatmul.mubr.f32.gmra.mrb[0].mxu0 %v501
    %v569 = vpop.f32.mrb[0].mxu0
    %v570 = vadd.f32 %v497, %v569
    %v571 = vpop.f32.mrb[0].mxu0
    %572 = vdwg.mxu0
    %vm573 = vcmask 27648
    %574 = vst.msk [vmem:[#allocation2] sm:$0xf] %vm573, %v570
    // Predicated region
    $region22: #{tpu_custom_call.1} parent=1 // pred_check
      _
    $region23: #{tpu_custom_call.1} parent=1 // pred_check_branch
      %576 = sbr.rel (0) target = $region25
    $region24: #{tpu_custom_call.1} parent=1 // pred_region
      %s578 = ssub.s32 64, 64
      %579 = vsyncadd [#allocation3], %s578
      %s581 = sshll.u32 [#allocation2], 4
      %s582 = int_to_ptr.vmem [resolvable:$true] %s581
      %584 = dma.vmem_to_hbm [thread:$0]  %s582, 64, %s5, [#allocation3]
    $region25: #{tpu_custom_call.1} parent=1 // pred_fallthru
      _
    // Predicated region
    $region26: #{tpu_custom_call.1} parent=1 // pred_check
      _
    $region27: #{tpu_custom_call.1} parent=1 // pred_check_branch
      %586 = sbr.rel (0) target = $region29
    $region28: #{tpu_custom_call.1} parent=1 // pred_region
      %587 = dma.done [#allocation3], 64
    $region29: #{tpu_custom_call.1} parent=1 // pred_fallthru
      _
    %588 = vsyncpa [#allocation3], 1

</llo_original>
